<compile_context>
chip_gen: v7x
topology: tpu7x:2x2x1
jax: 0.10.0
libtpu: 0.0.40
codegen_flags: <defaults>
</compile_context>

<pallas_src>
import math
import functools

import numpy as np
import jax
import jax.numpy as jnp
from jax.experimental import pallas as pl
from jax.experimental.pallas import tpu as pltpu


# ------------------------------ Pallas kernel -------------------------------

def _fused_chebnetii_kernel(K, C, ret_logit,
                            coe_ref,                         # scalar prefetch (SMEM)
                            x_ref, w1_ref, b1_ref, w2_ref, b2_ref, l_hbm_ref,
                            *refs):
    # outputs then scratch
    if ret_logit:
        logsm_ref, logit_ref = refs[0], refs[1]
        t_ref, l_vmem, l_sem = refs[2], refs[3], refs[4]
    else:
        logsm_ref, logit_ref = refs[0], None
        t_ref, l_vmem, l_sem = refs[1], refs[2], refs[3]

    k = pl.program_id(0)                    # Chebyshev order (strictly sequential)
    n, cp = logsm_ref.shape                 # static: nodes, padded class dim

    # ---- k == 0 : start the one-time L DMA, fused MLP, init T0 / accumulator.
    @pl.when(k == 0)
    def _():
        l_copy = pltpu.make_async_copy(l_hbm_ref, l_vmem, l_sem.at[0])
        if K >= 1:
            l_copy.start()                  # overlap HBM->VMEM with the MLP

        h = jnp.dot(x_ref[...], w1_ref[...],
                    preferred_element_type=jnp.float32) + b1_ref[...]
        h = jnp.maximum(h, 0.0)
        z = jnp.dot(h.astype(jnp.bfloat16), w2_ref[...],
                    preferred_element_type=jnp.float32) + b2_ref[...]

        t_ref[0, :, :] = z.astype(t_ref.dtype)             # T0
        t_ref[1, :, :] = jnp.zeros(z.shape, t_ref.dtype)   # "T_{-1}" = 0
        logsm_ref[...] = (0.5 * coe_ref[0]) * z            # acc = coe0/2 * T0

        if K >= 1:
            l_copy.wait()                   # L is VMEM-resident from here on

    # ---- k >= 1 : T_k = s * (L_tilde @ T_{k-1}) - T_{k-2},  s = 1 (k==1) else 2.
    #      Slot k%2 holds T_{k-2}; it is read before being overwritten with T_k
    #      (at k==1 that slot holds zeros, so the same expression yields T1).
    @pl.when(k >= 1)
    def _():
        scale = jnp.where(k == 1, jnp.float32(1.0), jnp.float32(2.0))
        ck = coe_ref[k]
        l_bf = l_vmem[...]                  # resident bf16 (N, N)

        def step(src, dst):
            d = jnp.dot(l_bf, t_ref[src, :, :],
                        preferred_element_type=jnp.float32)
            t_new = scale * d - t_ref[dst, :, :].astype(jnp.float32)
            logsm_ref[...] = logsm_ref[...] + ck * t_new    # f32 accumulator
            t_ref[dst, :, :] = t_new.astype(t_ref.dtype)    # bf16 state

        @pl.when(k % 2 == 1)
        def _():
            step(0, 1)

        @pl.when(k % 2 == 0)
        def _():
            step(1, 0)

    # ---- k == K : (optional logits) + lane-masked log_softmax epilogue.
    @pl.when(k == K)
    def _():
        logits = logsm_ref[...]
        if ret_logit:
            logit_ref[...] = logits
        lane = jax.lax.broadcasted_iota(jnp.int32, (n, cp), 1)
        masked = jnp.where(lane < C, logits, jnp.float32(-1e30))
        m = jnp.max(masked, axis=1, keepdims=True)
        s = masked - m
        lse = jnp.log(jnp.sum(jnp.exp(s), axis=1, keepdims=True))
        logsm_ref[...] = s - lse


# -------------------- coefficient / Laplacian glue (host/XLA) ----------------

def _cheb_interp_matrix(K):
    # M[i, j] = T_i(x_j),  x_j = cos((K - j + 0.5) * pi / (K + 1)); static constant.
    xs = np.array([math.cos((K - j + 0.5) * math.pi / (K + 1))
                   for j in range(K + 1)], dtype=np.float64)
    M = np.zeros((K + 1, K + 1), dtype=np.float64)
    M[0, :] = 1.0
    if K >= 1:
        M[1, :] = xs
    for i in range(2, K + 1):
        M[i, :] = 2.0 * xs * M[i - 1, :] - M[i - 2, :]
    return (2.0 / (K + 1)) * M


def chebyshev_coefficients(temp, K):
    # coe = 2/(K+1) * M @ relu(temp)   -- single tiny matvec, trivially fusable.
    M = jnp.asarray(_cheb_interp_matrix(K), dtype=jnp.float32)
    return (M @ jnp.maximum(temp.astype(jnp.float32), 0.0)).astype(jnp.float32)


def build_scaled_laplacian(adj):
    # L_tilde = L_sym - I = -D^{-1/2} A D^{-1/2}   (self-loop terms cancel)
    deg = jnp.sum(adj, axis=1)
    dinv = jnp.where(deg > 0, 1.0 / jnp.sqrt(jnp.maximum(deg, 1e-12)), 0.0)
    return -(dinv[:, None] * adj * dinv[None, :]).astype(jnp.float32)


# ----------------------------- VMEM budgeting --------------------------------

def _round_up(v, m):
    return ((v + m - 1) // m) * m


def _vmem_budget_bytes(n, f, h, cp, num_outputs):
    def tile_bytes(rows, cols, itemsize):
        # conservative (8, 128) tile padding of a VMEM buffer
        return _round_up(max(rows, 1), 8) * _round_up(max(cols, 1), 128) * itemsize

    need = 0
    need += 2 * tile_bytes(n, f, 2)                   # x (pipeline double-buffer) bf16
    need += 2 * tile_bytes(f, h, 2)                   # w1 bf16
    need += 2 * tile_bytes(1, h, 4)                   # b1 f32
    need += 2 * tile_bytes(h, cp, 2)                  # w2 (class-padded) bf16
    need += 2 * tile_bytes(1, cp, 4)                  # b2 f32
    need += num_outputs * 2 * tile_bytes(n, cp, 4)    # outputs f32
    need += 2 * tile_bytes(n, cp, 2)                  # T_{k-1}/T_{k-2} state bf16
    need += tile_bytes(n, n, 2)                       # resident L_tilde (single copy)
    return need


# ------------------------------- forward wrapper -----------------------------

def chebnetii_forward(x, adj, params, K, ret_logit=False):
    n, f = x.shape
    w1 = params["w1"].astype(jnp.bfloat16)
    b1 = params["b1"].reshape(1, -1).astype(jnp.float32)
    w2 = params["w2"].astype(jnp.float32)
    b2 = params["b2"].reshape(1, -1).astype(jnp.float32)
    h = w1.shape[1]
    c = w2.shape[1]

    cp = _round_up(c, 128)                 # lane-dense padded class dim

    # Zero-pad lin2 so padded class columns of z (and hence every T_k) are 0.
    w2p = jnp.zeros((h, cp), jnp.float32).at[:, :c].set(w2).astype(jnp.bfloat16)
    b2p = jnp.zeros((1, cp), jnp.float32).at[:, :c].set(b2)

    coe = chebyshev_coefficients(params["temp"], K)              # (K+1,) f32 -> SMEM
    l_tilde = build_scaled_laplacian(adj).astype(jnp.bfloat16)   # bf16 halves L bytes

    num_outputs = 2 if ret_logit else 1
    out_shapes = [jax.ShapeDtypeStruct((n, cp), jnp.float32)] * num_outputs
    out_specs = [pl.BlockSpec((n, cp), lambda k, coe_s: (0, 0))] * num_outputs

    grid_spec = pltpu.PrefetchScalarGridSpec(
        num_scalar_prefetch=1,                 # coe -> SMEM
        grid=(K + 1,),                         # Chebyshev order only (sequential)
        in_specs=[
            pl.BlockSpec((n, f), lambda k, coe_s: (0, 0)),    # x   (one DMA, resident)
            pl.BlockSpec((f, h), lambda k, coe_s: (0, 0)),    # w1
            pl.BlockSpec((1, h), lambda k, coe_s: (0, 0)),    # b1
            pl.BlockSpec((h, cp), lambda k, coe_s: (0, 0)),   # w2 (padded)
            pl.BlockSpec((1, cp), lambda k, coe_s: (0, 0)),   # b2 (padded)
            pl.BlockSpec(memory_space=pl.ANY),                # L_tilde: raw HBM ref
        ],
        out_specs=tuple(out_specs),
        scratch_shapes=[
            pltpu.VMEM((2, n, cp), jnp.bfloat16),   # T_{k-1}/T_{k-2} ping-pong (bf16)
            pltpu.VMEM((n, n), jnp.bfloat16),       # resident L_tilde copy
            pltpu.SemaphoreType.DMA((1,)),          # L-copy completion semaphore
        ],
    )

    vmem_need = _vmem_budget_bytes(n, f, h, cp, num_outputs)
    vmem_limit = min(max(int(vmem_need * 1.5) + (4 << 20), 32 << 20), 128 << 20)

    outs = pl.pallas_call(
        functools.partial(_fused_chebnetii_kernel, K, c, ret_logit),
        out_shape=tuple(out_shapes),
        grid_spec=grid_spec,
        compiler_params=pltpu.CompilerParams(
            # The Chebyshev recurrence is strictly sequential in k.
            dimension_semantics=("arbitrary",),
            vmem_limit_bytes=vmem_limit),
    )(coe, x.astype(jnp.bfloat16), w1, b1, w2p, b2p, l_tilde)

    if ret_logit:
        log_probs, logits = outs
        return logits[:, :c], log_probs[:, :c]
    (log_probs,) = outs
    return log_probs[:, :c]


# ------------------------------------ main -----------------------------------

if __name__ == "__main__":
    N, F, H, C, K = 64, 16, 32, 8, 10

    key = jax.random.PRNGKey(0)
    kx, ka, k1, k2, k3, k4 = jax.random.split(key, 6)

    # node features
    x = jax.random.normal(kx, (N, F), dtype=jnp.float32)

    # deterministic undirected adjacency (no self loops)
    rnd = jax.random.uniform(ka, (N, N))
    adj = (rnd < 0.1).astype(jnp.float32)
    adj = jnp.maximum(adj, adj.T)
    adj = adj * (1.0 - jnp.eye(N, dtype=jnp.float32))

    # Linear params (PyTorch-style uniform(-1/sqrt(fan_in), 1/sqrt(fan_in)))
    lim1 = 1.0 / math.sqrt(F)
    lim2 = 1.0 / math.sqrt(H)
    params = {
        "w1": jax.random.uniform(k1, (F, H), jnp.float32, -lim1, lim1),
        "b1": jax.random.uniform(k2, (1, H), jnp.float32, -lim1, lim1),
        "w2": jax.random.uniform(k3, (H, C), jnp.float32, -lim2, lim2),
        "b2": jax.random.uniform(k4, (1, C), jnp.float32, -lim2, lim2),
        # ChebnetII_prop.reset_parameters(): temp.data.fill_(1.0)
        "temp": jnp.ones((K + 1,), dtype=jnp.float32),
    }

    # ret_logit=False path
    log_probs = chebnetii_forward(x, adj, params, K, ret_logit=False)
    log_probs = jax.block_until_ready(log_probs)
    assert log_probs.shape == (N, C)
    row_sums = jnp.sum(jnp.exp(log_probs), axis=1)
    assert bool(jnp.all(jnp.abs(row_sums - 1.0) < 1e-3))

    # ret_logit=True path
    logits, log_probs2 = chebnetii_forward(x, adj, params, K, ret_logit=True)
    jax.block_until_ready((logits, log_probs2))
    assert logits.shape == (N, C)
    assert log_probs2.shape == (N, C)
    assert bool(jnp.all(jnp.abs(log_probs2 - log_probs) < 1e-3))

    print("KERNEL_OK")
</pallas_src>

<mosaic_0001>
module attributes {stable_mosaic.version = 11 : i64} {
  func.func @_fused_chebnetii_kernel(%arg0: i32, %arg1: memref<11xf32, #tpu.memory_space<smem>>, %arg2: memref<64x16xbf16, #tpu.memory_space<vmem>>, %arg3: memref<16x32xbf16, #tpu.memory_space<vmem>>, %arg4: memref<1x32xf32, #tpu.memory_space<vmem>>, %arg5: memref<32x128xbf16, #tpu.memory_space<vmem>>, %arg6: memref<1x128xf32, #tpu.memory_space<vmem>>, %arg7: memref<64x64xbf16, #tpu.memory_space<any>>, %arg8: memref<64x128xf32, #tpu.memory_space<vmem>>, %arg9: memref<2x64x128xbf16, #tpu.memory_space<vmem>>, %arg10: memref<64x64xbf16, #tpu.memory_space<vmem>>, %arg11: memref<1x!tpu.dma_semaphore, #tpu.memory_space<semaphore_mem>>) attributes {dimension_semantics = [#tpu.dimension_semantics<arbitrary>], iteration_bounds = array<i64: 11>, scalar_prefetch = 1 : i64, scratch_operands = 3 : i64, tpu.core_type = #tpu.core_type<tc>, window_params = [{pipeline_mode = #tpu.pipeline_mode<synchronous>, transform_indices = @transform_0, window_bounds = array<i64: 64, 16>}, {pipeline_mode = #tpu.pipeline_mode<synchronous>, transform_indices = @transform_1, window_bounds = array<i64: 16, 32>}, {pipeline_mode = #tpu.pipeline_mode<synchronous>, transform_indices = @transform_2, window_bounds = array<i64: 1, 32>}, {pipeline_mode = #tpu.pipeline_mode<synchronous>, transform_indices = @transform_3, window_bounds = array<i64: 32, 128>}, {pipeline_mode = #tpu.pipeline_mode<synchronous>, transform_indices = @transform_4, window_bounds = array<i64: 1, 128>}, {}, {pipeline_mode = #tpu.pipeline_mode<synchronous>, transform_indices = @transform_6, window_bounds = array<i64: 64, 128>}]} {
    %c0_i32 = arith.constant 0 : i32
    %0 = arith.cmpi eq, %arg0, %c0_i32 : i32
    %1 = arith.extui %0 : i1 to i32
    %c0_i32_0 = arith.constant 0 : i32
    %2 = arith.cmpi ne, %1, %c0_i32_0 : i32
    scf.if %2 {
      %c0_i32_3 = arith.constant 0 : i32
      %9 = tpu.memref_slice %arg11[%c0_i32_3] : memref<1x!tpu.dma_semaphore, #tpu.memory_space<semaphore_mem>> -> memref<1x!tpu.dma_semaphore, #tpu.memory_space<semaphore_mem>>
      %10 = tpu.memref_squeeze %9 : memref<1x!tpu.dma_semaphore, #tpu.memory_space<semaphore_mem>> -> memref<!tpu.dma_semaphore, #tpu.memory_space<semaphore_mem>>
      tpu.enqueue_dma source(%arg7 : memref<64x64xbf16, #tpu.memory_space<any>>) target(%arg10 : memref<64x64xbf16, #tpu.memory_space<vmem>>) target_semaphore(%10 : memref<!tpu.dma_semaphore, #tpu.memory_space<semaphore_mem>>)
      %c0 = arith.constant 0 : index
      %c0_4 = arith.constant 0 : index
      %11 = vector.load %arg2[%c0, %c0_4] : memref<64x16xbf16, #tpu.memory_space<vmem>>, vector<64x16xbf16>
      %c0_5 = arith.constant 0 : index
      %c0_6 = arith.constant 0 : index
      %12 = vector.load %arg3[%c0_5, %c0_6] : memref<16x32xbf16, #tpu.memory_space<vmem>>, vector<16x32xbf16>
      %cst = arith.constant dense<0.000000e+00> : vector<64x32xf32>
      %13 = tpu.matmul %11, %12, %cst {dimension_numbers = #tpu.dot_dimension_numbers<[1], [0], [0], [1], [0, 0, 1, 1], [], []>} : vector<64x16xbf16>, vector<16x32xbf16>, vector<64x32xf32> -> vector<64x32xf32>
      %c0_7 = arith.constant 0 : index
      %c0_8 = arith.constant 0 : index
      %14 = vector.load %arg4[%c0_7, %c0_8] : memref<1x32xf32, #tpu.memory_space<vmem>>, vector<1x32xf32>
      %15 = vector.broadcast %14 : vector<1x32xf32> to vector<64x32xf32>
      %16 = arith.addf %13, %15 : vector<64x32xf32>
      %cst_9 = arith.constant 0.000000e+00 : f32
      %17 = vector.broadcast %cst_9 : f32 to vector<64x32xf32>
      %18 = arith.maximumf %16, %17 : vector<64x32xf32>
      %19 = arith.truncf %18 : vector<64x32xf32> to vector<64x32xbf16>
      %c0_10 = arith.constant 0 : index
      %c0_11 = arith.constant 0 : index
      %20 = vector.load %arg5[%c0_10, %c0_11] : memref<32x128xbf16, #tpu.memory_space<vmem>>, vector<32x128xbf16>
      %cst_12 = arith.constant dense<0.000000e+00> : vector<64x128xf32>
      %21 = tpu.matmul %19, %20, %cst_12 {dimension_numbers = #tpu.dot_dimension_numbers<[1], [0], [0], [1], [0, 0, 1, 1], [], []>} : vector<64x32xbf16>, vector<32x128xbf16>, vector<64x128xf32> -> vector<64x128xf32>
      %c0_13 = arith.constant 0 : index
      %c0_14 = arith.constant 0 : index
      %22 = vector.load %arg6[%c0_13, %c0_14] : memref<1x128xf32, #tpu.memory_space<vmem>>, vector<1x128xf32>
      %23 = vector.broadcast %22 : vector<1x128xf32> to vector<64x128xf32>
      %24 = arith.addf %21, %23 : vector<64x128xf32>
      %25 = arith.truncf %24 : vector<64x128xf32> to vector<64x128xbf16>
      %c0_15 = arith.constant 0 : index
      %c0_16 = arith.constant 0 : index
      %c0_17 = arith.constant 0 : index
      %26 = vector.load %arg9[%c0_15, %c0_16, %c0_17] : memref<2x64x128xbf16, #tpu.memory_space<vmem>>, vector<1x64x128xbf16>
      %27 = vector.shape_cast %26 : vector<1x64x128xbf16> to vector<64x128xbf16>
      %28 = vector.shape_cast %25 : vector<64x128xbf16> to vector<1x64x128xbf16>
      tpu.vector_store %arg9[%c0_15, %c0_16, %c0_17], %28 {strides = array<i32>} : memref<2x64x128xbf16, #tpu.memory_space<vmem>>, vector<1x64x128xbf16>,
      %cst_18 = arith.constant 0.000000e+00 : bf16
      %29 = vector.broadcast %cst_18 : bf16 to vector<64x128xbf16>
      %c1 = arith.constant 1 : index
      %c0_19 = arith.constant 0 : index
      %c0_20 = arith.constant 0 : index
      %30 = vector.load %arg9[%c1, %c0_19, %c0_20] : memref<2x64x128xbf16, #tpu.memory_space<vmem>>, vector<1x64x128xbf16>
      %31 = vector.shape_cast %30 : vector<1x64x128xbf16> to vector<64x128xbf16>
      %32 = vector.shape_cast %29 : vector<64x128xbf16> to vector<1x64x128xbf16>
      tpu.vector_store %arg9[%c1, %c0_19, %c0_20], %32 {strides = array<i32>} : memref<2x64x128xbf16, #tpu.memory_space<vmem>>, vector<1x64x128xbf16>,
      %c0_21 = arith.constant 0 : index
      %33 = memref.load %arg1[%c0_21] : memref<11xf32, #tpu.memory_space<smem>>
      %cst_22 = arith.constant 5.000000e-01 : f32
      %34 = arith.mulf %cst_22, %33 : f32
      %35 = vector.broadcast %34 : f32 to vector<64x128xf32>
      %36 = arith.mulf %35, %24 : vector<64x128xf32>
      %c0_23 = arith.constant 0 : index
      %c0_24 = arith.constant 0 : index
      %37 = vector.load %arg8[%c0_23, %c0_24] : memref<64x128xf32, #tpu.memory_space<vmem>>, vector<64x128xf32>
      tpu.vector_store %arg8[%c0_23, %c0_24], %36 {strides = array<i32>} : memref<64x128xf32, #tpu.memory_space<vmem>>, vector<64x128xf32>,
      %c0_i32_25 = arith.constant 0 : i32
      %38 = tpu.memref_slice %arg11[%c0_i32_25] : memref<1x!tpu.dma_semaphore, #tpu.memory_space<semaphore_mem>> -> memref<1x!tpu.dma_semaphore, #tpu.memory_space<semaphore_mem>>
      %39 = tpu.memref_squeeze %38 : memref<1x!tpu.dma_semaphore, #tpu.memory_space<semaphore_mem>> -> memref<!tpu.dma_semaphore, #tpu.memory_space<semaphore_mem>>
      tpu.wait_dma2 semaphore(%39 : memref<!tpu.dma_semaphore, #tpu.memory_space<semaphore_mem>>) src(%arg7 : memref<64x64xbf16, #tpu.memory_space<any>>) dst(%arg10 : memref<64x64xbf16, #tpu.memory_space<vmem>>)
    } else {
    }
    %c1_i32 = arith.constant 1 : i32
    %3 = arith.cmpi sge, %arg0, %c1_i32 : i32
    %4 = arith.extui %3 : i1 to i32
    %c0_i32_1 = arith.constant 0 : i32
    %5 = arith.cmpi ne, %4, %c0_i32_1 : i32
    scf.if %5 {
      %c1_i32_3 = arith.constant 1 : i32
      %9 = arith.cmpi eq, %arg0, %c1_i32_3 : i32
      %cst = arith.constant 1.000000e+00 : f32
      %cst_4 = arith.constant 2.000000e+00 : f32
      %10 = arith.select %9, %cst, %cst_4 : f32
      %11 = arith.index_cast %arg0 : i32 to index
      %12 = memref.load %arg1[%11] : memref<11xf32, #tpu.memory_space<smem>>
      %c0 = arith.constant 0 : index
      %c0_5 = arith.constant 0 : index
      %13 = vector.load %arg10[%c0, %c0_5] : memref<64x64xbf16, #tpu.memory_space<vmem>>, vector<64x64xbf16>
      %c2_i32 = arith.constant 2 : i32
      %c0_i32_6 = arith.constant 0 : i32
      %14 = arith.cmpi eq, %c2_i32, %c0_i32_6 : i32
      %c1_i32_7 = arith.constant 1 : i32
      %15 = arith.select %14, %c1_i32_7, %c2_i32 : i32
      %16 = arith.remsi %arg0, %15 : i32
      %c0_i32_8 = arith.constant 0 : i32
      %17 = arith.cmpi ne, %16, %c0_i32_8 : i32
      %c0_i32_9 = arith.constant 0 : i32
      %18 = arith.cmpi slt, %16, %c0_i32_9 : i32
      %c0_i32_10 = arith.constant 0 : i32
      %19 = arith.cmpi slt, %15, %c0_i32_10 : i32
      %20 = arith.xori %18, %19 : i1
      %21 = arith.andi %20, %17 : i1
      %22 = arith.addi %16, %15 : i32
      %23 = arith.select %21, %22, %16 : i32
      %c1_i32_11 = arith.constant 1 : i32
      %24 = arith.cmpi eq, %23, %c1_i32_11 : i32
      %25 = arith.extui %24 : i1 to i32
      %c0_i32_12 = arith.constant 0 : i32
      %26 = arith.cmpi ne, %25, %c0_i32_12 : i32
      scf.if %26 {
        %c0_21 = arith.constant 0 : index
        %c0_22 = arith.constant 0 : index
        %c0_23 = arith.constant 0 : index
        %40 = vector.load %arg9[%c0_21, %c0_22, %c0_23] : memref<2x64x128xbf16, #tpu.memory_space<vmem>>, vector<1x64x128xbf16>
        %41 = vector.shape_cast %40 : vector<1x64x128xbf16> to vector<64x128xbf16>
        %cst_24 = arith.constant dense<0.000000e+00> : vector<64x128xf32>
        %42 = tpu.matmul %13, %41, %cst_24 {dimension_numbers = #tpu.dot_dimension_numbers<[1], [0], [0], [1], [0, 0, 1, 1], [], []>} : vector<64x64xbf16>, vector<64x128xbf16>, vector<64x128xf32> -> vector<64x128xf32>
        %43 = vector.broadcast %10 : f32 to vector<64x128xf32>
        %44 = arith.mulf %43, %42 : vector<64x128xf32>
        %c1 = arith.constant 1 : index
        %c0_25 = arith.constant 0 : index
        %c0_26 = arith.constant 0 : index
        %45 = vector.load %arg9[%c1, %c0_25, %c0_26] : memref<2x64x128xbf16, #tpu.memory_space<vmem>>, vector<1x64x128xbf16>
        %46 = vector.shape_cast %45 : vector<1x64x128xbf16> to vector<64x128xbf16>
        %47 = arith.extf %46 : vector<64x128xbf16> to vector<64x128xf32>
        %48 = arith.subf %44, %47 : vector<64x128xf32>
        %c0_27 = arith.constant 0 : index
        %c0_28 = arith.constant 0 : index
        %49 = vector.load %arg8[%c0_27, %c0_28] : memref<64x128xf32, #tpu.memory_space<vmem>>, vector<64x128xf32>
        %50 = vector.broadcast %12 : f32 to vector<64x128xf32>
        %51 = arith.mulf %50, %48 : vector<64x128xf32>
        %52 = arith.addf %49, %51 : vector<64x128xf32>
        %c0_29 = arith.constant 0 : index
        %c0_30 = arith.constant 0 : index
        %53 = vector.load %arg8[%c0_29, %c0_30] : memref<64x128xf32, #tpu.memory_space<vmem>>, vector<64x128xf32>
        tpu.vector_store %arg8[%c0_29, %c0_30], %52 {strides = array<i32>} : memref<64x128xf32, #tpu.memory_space<vmem>>, vector<64x128xf32>,
        %54 = arith.truncf %48 : vector<64x128xf32> to vector<64x128xbf16>
        %c1_31 = arith.constant 1 : index
        %c0_32 = arith.constant 0 : index
        %c0_33 = arith.constant 0 : index
        %55 = vector.load %arg9[%c1_31, %c0_32, %c0_33] : memref<2x64x128xbf16, #tpu.memory_space<vmem>>, vector<1x64x128xbf16>
        %56 = vector.shape_cast %55 : vector<1x64x128xbf16> to vector<64x128xbf16>
        %57 = vector.shape_cast %54 : vector<64x128xbf16> to vector<1x64x128xbf16>
        tpu.vector_store %arg9[%c1_31, %c0_32, %c0_33], %57 {strides = array<i32>} : memref<2x64x128xbf16, #tpu.memory_space<vmem>>, vector<1x64x128xbf16>,
      } else {
      }
      %c2_i32_13 = arith.constant 2 : i32
      %c0_i32_14 = arith.constant 0 : i32
      %27 = arith.cmpi eq, %c2_i32_13, %c0_i32_14 : i32
      %c1_i32_15 = arith.constant 1 : i32
      %28 = arith.select %27, %c1_i32_15, %c2_i32_13 : i32
      %29 = arith.remsi %arg0, %28 : i32
      %c0_i32_16 = arith.constant 0 : i32
      %30 = arith.cmpi ne, %29, %c0_i32_16 : i32
      %c0_i32_17 = arith.constant 0 : i32
      %31 = arith.cmpi slt, %29, %c0_i32_17 : i32
      %c0_i32_18 = arith.constant 0 : i32
      %32 = arith.cmpi slt, %28, %c0_i32_18 : i32
      %33 = arith.xori %31, %32 : i1
      %34 = arith.andi %33, %30 : i1
      %35 = arith.addi %29, %28 : i32
      %36 = arith.select %34, %35, %29 : i32
      %c0_i32_19 = arith.constant 0 : i32
      %37 = arith.cmpi eq, %36, %c0_i32_19 : i32
      %38 = arith.extui %37 : i1 to i32
      %c0_i32_20 = arith.constant 0 : i32
      %39 = arith.cmpi ne, %38, %c0_i32_20 : i32
      scf.if %39 {
        %c1 = arith.constant 1 : index
        %c0_21 = arith.constant 0 : index
        %c0_22 = arith.constant 0 : index
        %40 = vector.load %arg9[%c1, %c0_21, %c0_22] : memref<2x64x128xbf16, #tpu.memory_space<vmem>>, vector<1x64x128xbf16>
        %41 = vector.shape_cast %40 : vector<1x64x128xbf16> to vector<64x128xbf16>
        %cst_23 = arith.constant dense<0.000000e+00> : vector<64x128xf32>
        %42 = tpu.matmul %13, %41, %cst_23 {dimension_numbers = #tpu.dot_dimension_numbers<[1], [0], [0], [1], [0, 0, 1, 1], [], []>} : vector<64x64xbf16>, vector<64x128xbf16>, vector<64x128xf32> -> vector<64x128xf32>
        %43 = vector.broadcast %10 : f32 to vector<64x128xf32>
        %44 = arith.mulf %43, %42 : vector<64x128xf32>
        %c0_24 = arith.constant 0 : index
        %c0_25 = arith.constant 0 : index
        %c0_26 = arith.constant 0 : index
        %45 = vector.load %arg9[%c0_24, %c0_25, %c0_26] : memref<2x64x128xbf16, #tpu.memory_space<vmem>>, vector<1x64x128xbf16>
        %46 = vector.shape_cast %45 : vector<1x64x128xbf16> to vector<64x128xbf16>
        %47 = arith.extf %46 : vector<64x128xbf16> to vector<64x128xf32>
        %48 = arith.subf %44, %47 : vector<64x128xf32>
        %c0_27 = arith.constant 0 : index
        %c0_28 = arith.constant 0 : index
        %49 = vector.load %arg8[%c0_27, %c0_28] : memref<64x128xf32, #tpu.memory_space<vmem>>, vector<64x128xf32>
        %50 = vector.broadcast %12 : f32 to vector<64x128xf32>
        %51 = arith.mulf %50, %48 : vector<64x128xf32>
        %52 = arith.addf %49, %51 : vector<64x128xf32>
        %c0_29 = arith.constant 0 : index
        %c0_30 = arith.constant 0 : index
        %53 = vector.load %arg8[%c0_29, %c0_30] : memref<64x128xf32, #tpu.memory_space<vmem>>, vector<64x128xf32>
        tpu.vector_store %arg8[%c0_29, %c0_30], %52 {strides = array<i32>} : memref<64x128xf32, #tpu.memory_space<vmem>>, vector<64x128xf32>,
        %54 = arith.truncf %48 : vector<64x128xf32> to vector<64x128xbf16>
        %c0_31 = arith.constant 0 : index
        %c0_32 = arith.constant 0 : index
        %c0_33 = arith.constant 0 : index
        %55 = vector.load %arg9[%c0_31, %c0_32, %c0_33] : memref<2x64x128xbf16, #tpu.memory_space<vmem>>, vector<1x64x128xbf16>
        %56 = vector.shape_cast %55 : vector<1x64x128xbf16> to vector<64x128xbf16>
        %57 = vector.shape_cast %54 : vector<64x128xbf16> to vector<1x64x128xbf16>
        tpu.vector_store %arg9[%c0_31, %c0_32, %c0_33], %57 {strides = array<i32>} : memref<2x64x128xbf16, #tpu.memory_space<vmem>>, vector<1x64x128xbf16>,
      } else {
      }
    } else {
    }
    %c10_i32 = arith.constant 10 : i32
    %6 = arith.cmpi eq, %arg0, %c10_i32 : i32
    %7 = arith.extui %6 : i1 to i32
    %c0_i32_2 = arith.constant 0 : i32
    %8 = arith.cmpi ne, %7, %c0_i32_2 : i32
    scf.if %8 {
      %c0 = arith.constant 0 : index
      %c0_3 = arith.constant 0 : index
      %9 = vector.load %arg8[%c0, %c0_3] : memref<64x128xf32, #tpu.memory_space<vmem>>, vector<64x128xf32>
      %10 = tpu.iota {dimensions = array<i32: 1>} : vector<64x128xi32>
      %c8_i32 = arith.constant 8 : i32
      %11 = vector.broadcast %c8_i32 : i32 to vector<64x128xi32>
      %12 = arith.cmpi slt, %10, %11 : vector<64x128xi32>
      %cst = arith.constant -1.000000e+30 : f32
      %13 = vector.broadcast %cst : f32 to vector<64x128xf32>
      %14 = arith.select %12, %9, %13 : vector<64x128xi1>, vector<64x128xf32>
      %cst_4 = arith.constant dense<0xFF800000> : vector<64xf32>
      %15 = vector.multi_reduction <maximumf>, %14, %cst_4 [1] : vector<64x128xf32> to vector<64xf32>
      %16 = vector.shape_cast %15 : vector<64xf32> to vector<64x1xf32>
      %17 = vector.broadcast %16 : vector<64x1xf32> to vector<64x128xf32>
      %18 = arith.subf %14, %17 : vector<64x128xf32>
      %19 = math.exp %18 : vector<64x128xf32>
      %cst_5 = arith.constant dense<0.000000e+00> : vector<64xf32>
      %20 = vector.multi_reduction <add>, %19, %cst_5 [1] : vector<64x128xf32> to vector<64xf32>
      %21 = vector.shape_cast %20 : vector<64xf32> to vector<64x1xf32>
      %22 = math.log %21 : vector<64x1xf32>
      %23 = vector.broadcast %22 : vector<64x1xf32> to vector<64x128xf32>
      %24 = arith.subf %18, %23 : vector<64x128xf32>
      %c0_6 = arith.constant 0 : index
      %c0_7 = arith.constant 0 : index
      %25 = vector.load %arg8[%c0_6, %c0_7] : memref<64x128xf32, #tpu.memory_space<vmem>>, vector<64x128xf32>
      tpu.vector_store %arg8[%c0_6, %c0_7], %24 {strides = array<i32>} : memref<64x128xf32, #tpu.memory_space<vmem>>, vector<64x128xf32>,
    } else {
    }
    return
  }
  func.func @transform_0(%arg0: i32, %arg1: memref<11xf32, #tpu.memory_space<smem>>) -> (i32, i32) {
    %c0_i32 = arith.constant 0 : i32
    %c0_i32_0 = arith.constant 0 : i32
    %c0_i32_1 = arith.constant 0 : i32
    return %c0_i32, %c0_i32_0 : i32, i32
  }
  func.func @transform_1(%arg0: i32, %arg1: memref<11xf32, #tpu.memory_space<smem>>) -> (i32, i32) {
    %c0_i32 = arith.constant 0 : i32
    %c0_i32_0 = arith.constant 0 : i32
    %c0_i32_1 = arith.constant 0 : i32
    return %c0_i32, %c0_i32_0 : i32, i32
  }
  func.func @transform_2(%arg0: i32, %arg1: memref<11xf32, #tpu.memory_space<smem>>) -> (i32, i32) {
    %c0_i32 = arith.constant 0 : i32
    %c0_i32_0 = arith.constant 0 : i32
    %c0_i32_1 = arith.constant 0 : i32
    return %c0_i32, %c0_i32_0 : i32, i32
  }
  func.func @transform_3(%arg0: i32, %arg1: memref<11xf32, #tpu.memory_space<smem>>) -> (i32, i32) {
    %c0_i32 = arith.constant 0 : i32
    %c0_i32_0 = arith.constant 0 : i32
    %c0_i32_1 = arith.constant 0 : i32
    return %c0_i32, %c0_i32_0 : i32, i32
  }
  func.func @transform_4(%arg0: i32, %arg1: memref<11xf32, #tpu.memory_space<smem>>) -> (i32, i32) {
    %c0_i32 = arith.constant 0 : i32
    %c0_i32_0 = arith.constant 0 : i32
    %c0_i32_1 = arith.constant 0 : i32
    return %c0_i32, %c0_i32_0 : i32, i32
  }
  func.func @transform_6(%arg0: i32, %arg1: memref<11xf32, #tpu.memory_space<smem>>) -> (i32, i32) {
    %c0_i32 = arith.constant 0 : i32
    %c0_i32_0 = arith.constant 0 : i32
    %c0_i32_1 = arith.constant 0 : i32
    return %c0_i32, %c0_i32_0 : i32, i32
  }
}

</mosaic_0001>

<llo_original>
// kernel: tpu_custom_call.1
$region0: #{tpu_custom_call.1}
  #allocation0 [shape = 'u32[]', space=smem, size = 0x4, offset = 0x4, fixed_abs, tag = 'smem constant byte address 0x4 - core index']
  #allocation1 [shape = 'u32[144,128]{1,0:T(1,128)}', space=vmem, size = 0x12000, scoped, tag = 'internal scratch']
  #allocation2 [shape = 'bf16[2,64,128]{2,1,0:T(16,128)(2,1)}', space=vmem, size = 0x8000, scoped, tag = 'scratch operand']
  #allocation3 [shape = 'bf16[64,64]{1,0:T(16,128)(2,1)}', space=vmem, size = 0x4000, scoped, tag = 'scratch operand']
  #allocation4 [shape = 's32[1]{0}', space=sflag, size = 0x4, scoped, tag = 'scratch operand']
  #allocation5 [shape = 's32[1]{0}', space=sflag, size = 0x4, scoped, tag = 'scoped memory for tpu_custom_call.1']
  #allocation6 [shape = 'u8[512]{0}', space=smem, size = 0x200, scoped, tag = 'prefetched SMEM operand 0']
  #allocation9 [shape = 's32[]', space=sflag, size = 0x4, offset = 0, fixed_abs, tag = 'sflag constant byte address 0x0 - dummy sync flag']
  %s0 = inlined_call_operand.vmem [shape: f32[11], index: 0, kind: input, shape index: {}]
  %s1 = inlined_call_operand.vmem [shape: bf16[64,16], index: 1, kind: input, shape index: {}]
  %s2 = inlined_call_operand.vmem [shape: bf16[16,32], index: 2, kind: input, shape index: {}]
  %s3 = inlined_call_operand.vmem [shape: f32[1,32], index: 3, kind: input, shape index: {}]
  %s4 = inlined_call_operand.vmem [shape: bf16[32,128], index: 4, kind: input, shape index: {}]
  %s5 = inlined_call_operand.vmem [shape: f32[1,128], index: 5, kind: input, shape index: {}]
  %s6 = inlined_call_operand.vmem [shape: bf16[64,64], index: 6, kind: input, shape index: {}]
  %s7 = inlined_call_operand.hbm [shape: f32[64,128], index: 7, kind: output, shape index: {}]
  %s8 = sld [smem:[#allocation0]]
  $region107: #{tpu_custom_call.1} parent=0
    _
  %s10 = ssub.s32 1, %s8
  %s11 = scalar_select 0, %s10, %s8
  %s12 = sshll.u32 %s0, 4
  %s13 = int_to_ptr.vmem [resolvable:$true] %s12
  %15 = dma.vmem_to_smem %s13, 16, [#allocation6], [#allocation5]
  %16 = dma.done [#allocation5], 16
  %17 = sfence
  $region1: #{tpu_custom_call.1} parent=0
    #allocation7 [shape = 'u8[32768]{0}', space=vmem, size = 0x8000, scoped, tag = 'output window, operand 0, single buffered']
    #allocation8 [shape = 's32[2]{0}', space=sflag, size = 0x8, scoped, tag = 'scoped memory for tpu_custom_call.1']
    %18 = vsyncpa [#allocation8], 0
    loop: start=0, step=1, limit=13
    $region2: #{tpu_custom_call.1} parent=1 // loop_pre_header
      _
    $region3: #{tpu_custom_call.1} parent=1 // loop_header
      %s20 = sphi 0, %s24
      %p21 = scmp.ge.s32.totalorder %s20, 13
      %s28 = sphi 0, %s28
      %s30 = sphi 0, %s28
      %s31 = sphi 0, %s30
      %s45 = sphi 0, %s31
      %s49 = sphi 0, %s49
      %s51 = sphi 0, %s49
      %s52 = sphi 0, %s51
      %s66 = sphi 0, %s52
      %s70 = sphi 0, %s70
      %s72 = sphi 0, %s70
      %s73 = sphi 0, %s72
      %s87 = sphi 0, %s73
      %s91 = sphi 0, %s91
      %s93 = sphi 0, %s91
      %s94 = sphi 0, %s93
      %s108 = sphi 0, %s94
      %s112 = sphi 0, %s112
      %s114 = sphi 0, %s112
      %s115 = sphi 0, %s114
      %s129 = sphi 0, %s115
      %s133 = sphi 0, %s133
      %s135 = sphi 0, %s133
      %s136 = sphi 0, %s135
      %s150 = sphi 0, %s136
    $region4: #{tpu_custom_call.1} parent=1 // loop_header_branch
      %23 = sbr.rel (%p21) target = $region8
    $region5: #{tpu_custom_call.1} parent=1 // loop_body
      %s25 = ssub.s32 %s20, 1
      %s26 = ssub.s32 %s20, 2
      %s27 = sadd.s32 %s20, 1
      %s29 = sadd.s32 %s28, 1
      %p32 = scmp.eq.s32.totalorder %s20, 10
      %p33 = scmp.ne.s32.totalorder %s28, %s30
      %p34 = scmp.eq.s32.totalorder %s20, 0
      %p35 = por %p33, %p34
      %p36 = scmp.ne.s32.totalorder %s28, %s30
      %p37 = scmp.eq.s32.totalorder %s25, 10
      %p38 = por %p36, %p37
      %p39 = scmp.ne.s32.totalorder %s30, %s31
      %p40 = scmp.eq.s32.totalorder %s25, 0
      %p41 = por %p39, %p40
      %p42 = scmp.ne.s32.totalorder %s30, %s31
      %p43 = scmp.eq.s32.totalorder %s26, 10
      %p44 = por %p42, %p43
      %p46 = scmp.ne.s32.totalorder %s31, %s45
      %p47 = scmp.eq.s32.totalorder %s26, 0
      %p48 = por %p46, %p47
      %s50 = sadd.s32 %s49, 1
      %p53 = scmp.eq.s32.totalorder %s20, 10
      %p54 = scmp.ne.s32.totalorder %s49, %s51
      %p55 = scmp.eq.s32.totalorder %s20, 0
      %p56 = por %p54, %p55
      %p57 = scmp.ne.s32.totalorder %s49, %s51
      %p58 = scmp.eq.s32.totalorder %s25, 10
      %p59 = por %p57, %p58
      %p60 = scmp.ne.s32.totalorder %s51, %s52
      %p61 = scmp.eq.s32.totalorder %s25, 0
      %p62 = por %p60, %p61
      %p63 = scmp.ne.s32.totalorder %s51, %s52
      %p64 = scmp.eq.s32.totalorder %s26, 10
      %p65 = por %p63, %p64
      %p67 = scmp.ne.s32.totalorder %s52, %s66
      %p68 = scmp.eq.s32.totalorder %s26, 0
      %p69 = por %p67, %p68
      %s71 = sadd.s32 %s70, 1
      %p74 = scmp.eq.s32.totalorder %s20, 10
      %p75 = scmp.ne.s32.totalorder %s70, %s72
      %p76 = scmp.eq.s32.totalorder %s20, 0
      %p77 = por %p75, %p76
      %p78 = scmp.ne.s32.totalorder %s70, %s72
      %p79 = scmp.eq.s32.totalorder %s25, 10
      %p80 = por %p78, %p79
      %p81 = scmp.ne.s32.totalorder %s72, %s73
      %p82 = scmp.eq.s32.totalorder %s25, 0
      %p83 = por %p81, %p82
      %p84 = scmp.ne.s32.totalorder %s72, %s73
      %p85 = scmp.eq.s32.totalorder %s26, 10
      %p86 = por %p84, %p85
      %p88 = scmp.ne.s32.totalorder %s73, %s87
      %p89 = scmp.eq.s32.totalorder %s26, 0
      %p90 = por %p88, %p89
      %s92 = sadd.s32 %s91, 1
      %p95 = scmp.eq.s32.totalorder %s20, 10
      %p96 = scmp.ne.s32.totalorder %s91, %s93
      %p97 = scmp.eq.s32.totalorder %s20, 0
      %p98 = por %p96, %p97
      %p99 = scmp.ne.s32.totalorder %s91, %s93
      %p100 = scmp.eq.s32.totalorder %s25, 10
      %p101 = por %p99, %p100
      %p102 = scmp.ne.s32.totalorder %s93, %s94
      %p103 = scmp.eq.s32.totalorder %s25, 0
      %p104 = por %p102, %p103
      %p105 = scmp.ne.s32.totalorder %s93, %s94
      %p106 = scmp.eq.s32.totalorder %s26, 10
      %p107 = por %p105, %p106
      %p109 = scmp.ne.s32.totalorder %s94, %s108
      %p110 = scmp.eq.s32.totalorder %s26, 0
      %p111 = por %p109, %p110
      %s113 = sadd.s32 %s112, 1
      %p116 = scmp.eq.s32.totalorder %s20, 10
      %p117 = scmp.ne.s32.totalorder %s112, %s114
      %p118 = scmp.eq.s32.totalorder %s20, 0
      %p119 = por %p117, %p118
      %p120 = scmp.ne.s32.totalorder %s112, %s114
      %p121 = scmp.eq.s32.totalorder %s25, 10
      %p122 = por %p120, %p121
      %p123 = scmp.ne.s32.totalorder %s114, %s115
      %p124 = scmp.eq.s32.totalorder %s25, 0
      %p125 = por %p123, %p124
      %p126 = scmp.ne.s32.totalorder %s114, %s115
      %p127 = scmp.eq.s32.totalorder %s26, 10
      %p128 = por %p126, %p127
      %p130 = scmp.ne.s32.totalorder %s115, %s129
      %p131 = scmp.eq.s32.totalorder %s26, 0
      %p132 = por %p130, %p131
      %s134 = sadd.s32 %s133, 1
      %p137 = scmp.eq.s32.totalorder %s20, 10
      %p138 = scmp.ne.s32.totalorder %s133, %s135
      %p139 = scmp.eq.s32.totalorder %s20, 0
      %p140 = por %p138, %p139
      %p141 = scmp.ne.s32.totalorder %s133, %s135
      %p142 = scmp.eq.s32.totalorder %s25, 10
      %p143 = por %p141, %p142
      %p144 = scmp.ne.s32.totalorder %s135, %s136
      %p145 = scmp.eq.s32.totalorder %s25, 0
      %p146 = por %p144, %p145
      %p147 = scmp.ne.s32.totalorder %s135, %s136
      %p148 = scmp.eq.s32.totalorder %s26, 10
      %p149 = por %p147, %p148
      %p151 = scmp.ne.s32.totalorder %s136, %s150
      %p152 = scmp.eq.s32.totalorder %s26, 0
      %p153 = por %p151, %p152
      %p154 = scmp.le.s32.totalorder 1, %s20
      %p155 = scmp.lt.s32.totalorder %s20, 12
      %p156 = pnand %p154, %p155
      %p157 = pneg %p156
      // Predicated region
      $region9: #{tpu_custom_call.1} parent=5 // pred_check
        _
      $region10: #{tpu_custom_call.1} parent=5 // pred_check_branch
        %159 = sbr.rel (%p156) target = $region12
      $region11: #{tpu_custom_call.1} parent=5 // pred_region
        %s160 = ssub.s32 %s20, 1
        // Predicated region
        $region13: #{tpu_custom_call.1} parent=11 // pred_check
          %p161 = pneg %p41
        $region14: #{tpu_custom_call.1} parent=11 // pred_check_branch
          %163 = sbr.rel (%p161) target = $region16
        $region15: #{tpu_custom_call.1} parent=11 // pred_region
          _
        $region16: #{tpu_custom_call.1} parent=11 // pred_fallthru
          _
        // Predicated region
        $region17: #{tpu_custom_call.1} parent=11 // pred_check
          %p164 = pneg %p62
        $region18: #{tpu_custom_call.1} parent=11 // pred_check_branch
          %166 = sbr.rel (%p164) target = $region20
        $region19: #{tpu_custom_call.1} parent=11 // pred_region
          _
        $region20: #{tpu_custom_call.1} parent=11 // pred_fallthru
          _
        // Predicated region
        $region21: #{tpu_custom_call.1} parent=11 // pred_check
          %p167 = pneg %p83
        $region22: #{tpu_custom_call.1} parent=11 // pred_check_branch
          %169 = sbr.rel (%p167) target = $region24
        $region23: #{tpu_custom_call.1} parent=11 // pred_region
          _
        $region24: #{tpu_custom_call.1} parent=11 // pred_fallthru
          _
        // Predicated region
        $region25: #{tpu_custom_call.1} parent=11 // pred_check
          %p170 = pneg %p104
        $region26: #{tpu_custom_call.1} parent=11 // pred_check_branch
          %172 = sbr.rel (%p170) target = $region28
        $region27: #{tpu_custom_call.1} parent=11 // pred_region
          _
        $region28: #{tpu_custom_call.1} parent=11 // pred_fallthru
          _
        // Predicated region
        $region29: #{tpu_custom_call.1} parent=11 // pred_check
          %p173 = pneg %p125
        $region30: #{tpu_custom_call.1} parent=11 // pred_check_branch
          %175 = sbr.rel (%p173) target = $region32
        $region31: #{tpu_custom_call.1} parent=11 // pred_region
          _
        $region32: #{tpu_custom_call.1} parent=11 // pred_fallthru
          _
      $region12: #{tpu_custom_call.1} parent=5 // pred_fallthru
        _
      %p176 = scmp.lt.s32.totalorder %s20, 11
      // Predicated region
      $region33: #{tpu_custom_call.1} parent=5 // pred_check
        %p177 = pneg %p176
      $region34: #{tpu_custom_call.1} parent=5 // pred_check_branch
        %179 = sbr.rel (%p177) target = $region36
      $region35: #{tpu_custom_call.1} parent=5 // pred_region
        _
      $region36: #{tpu_custom_call.1} parent=5 // pred_fallthru
        _
      %p180 = scmp.le.s32.totalorder 1, %s20
      %p181 = scmp.lt.s32.totalorder %s20, 12
      %p182 = pnand %p180, %p181
      %p183 = pneg %p182
      // Predicated region
      $region37: #{tpu_custom_call.1} parent=5 // pred_check
        _
      $region38: #{tpu_custom_call.1} parent=5 // pred_check_branch
        %185 = sbr.rel (%p182) target = $region40
      $region39: #{tpu_custom_call.1} parent=5 // pred_region
        %s186 = ssub.s32 %s20, 1
        %p187 = pneg %p41
        %p188 = pneg %p38
        %p189 = pneg %p62
        %p190 = pneg %p59
        %p191 = pneg %p83
        %p192 = pneg %p80
        %p193 = pneg %p104
        %p194 = pneg %p101
        %p195 = pneg %p125
        %p196 = pneg %p122
        %p197 = pneg %p146
        %p198 = pneg %p143
        %p200 = scmp.eq.s32.totalorder %s25, 0
        // Predicated region
        $region41: #{tpu_custom_call.1} parent=39 // pred_check
          %p201 = pneg %p200
        $region42: #{tpu_custom_call.1} parent=39 // pred_check_branch
          %203 = sbr.rel (%p201) target = $region44
        $region43: #{tpu_custom_call.1} parent=39 // pred_region
          %p205 = scmp.lt.u32.totalorder 32, 8
          %p206 = pneg %p205
          // Predicated region
          $region45: #{tpu_custom_call.1} parent=43 // pred_check
            _
          $region46: #{tpu_custom_call.1} parent=43 // pred_check_branch
            %208 = sbr.rel (%p205) target = $region48
          $region47: #{tpu_custom_call.1} parent=43 // pred_region
            %s223 = sand.u32 32, 7
            %p224 = scmp.eq.s32.totalorder %s223, 0
            // Predicated region
            $region60: #{tpu_custom_call.1} parent=47 // pred_check
              %p225 = pneg %p224
            $region61: #{tpu_custom_call.1} parent=47 // pred_check_branch
              %227 = sbr.rel (%p225) target = $region63
            $region62: #{tpu_custom_call.1} parent=47 // pred_region
              loop: start=0, step=1, limit=1
              $region64: #{tpu_custom_call.1} parent=62 // loop_pre_header
                _
              $region65: #{tpu_custom_call.1} parent=62 // loop_header
                %s229 = sphi 0, %s233
                %p230 = scmp.ge.s32.totalorder %s229, 1
                %s234 = sphi %s6, %s6
                %s235 = sphi [#allocation3], [#allocation3]
              $region66: #{tpu_custom_call.1} parent=62 // loop_header_branch
                %232 = sbr.rel (%p230) target = $region70
              $region67: #{tpu_custom_call.1} parent=62 // loop_body
                %v236 = vld [vmem:[%s234] sm:$0xff]
                %237 = vst [vmem:[%s235] sm:$0xff] %v236
                %v238 = vld [vmem:[%s234 + $0x8] sm:$0xff]
                %239 = vst [vmem:[%s235 + $0x8] sm:$0xff] %v238
                %v240 = vld [vmem:[%s234 + $0x10] sm:$0xff]
                %241 = vst [vmem:[%s235 + $0x10] sm:$0xff] %v240
                %v242 = vld [vmem:[%s234 + $0x18] sm:$0xff]
                %243 = vst [vmem:[%s235 + $0x18] sm:$0xff] %v242
              $region68: #{tpu_custom_call.1} parent=62 // loop_footer
                %s233 = sadd.s32 1, %s229
              $region69: #{tpu_custom_call.1} parent=62 // loop_footer_branch
                %228 = sbr.rel target = $region65
              $region70: #{tpu_custom_call.1} parent=62 // loop_exit
                _
            $region63: #{tpu_custom_call.1} parent=47 // pred_fallthru
              _
            %p244 = pneg %p224
            // Predicated region
            $region71: #{tpu_custom_call.1} parent=47 // pred_check
              _
            $region72: #{tpu_custom_call.1} parent=47 // pred_check_branch
              %246 = sbr.rel (%p224) target = $region74
            $region73: #{tpu_custom_call.1} parent=47 // pred_region
              %s247 = sand.u32 32, 7
            $region74: #{tpu_custom_call.1} parent=47 // pred_fallthru
              _
          $region48: #{tpu_custom_call.1} parent=43 // pred_fallthru
            _
          // Predicated region
          $region49: #{tpu_custom_call.1} parent=43 // pred_check
            %p209 = pneg %p205
          $region50: #{tpu_custom_call.1} parent=43 // pred_check_branch
            %211 = sbr.rel (%p209) target = $region52
          $region51: #{tpu_custom_call.1} parent=43 // pred_region
            %s212 = sshllo.u32 0, 32
            loop: start=0, step=1, limit=1
            $region53: #{tpu_custom_call.1} parent=51 // loop_pre_header
              _
            $region54: #{tpu_custom_call.1} parent=51 // loop_header
              %s214 = sphi 0, %s218
              %p215 = scmp.ge.s32.totalorder %s214, 1
              %s219 = sphi %s6, %s6
              %s220 = sphi [#allocation3], [#allocation3]
            $region55: #{tpu_custom_call.1} parent=51 // loop_header_branch
              %217 = sbr.rel (%p215) target = $region59
            $region56: #{tpu_custom_call.1} parent=51 // loop_body
              %v221 = vld [vmem:[%s219] sm:%s212]
              %222 = vst [vmem:[%s220] sm:%s212] %v221
            $region57: #{tpu_custom_call.1} parent=51 // loop_footer
              %s218 = sadd.s32 1, %s214
            $region58: #{tpu_custom_call.1} parent=51 // loop_footer_branch
              %213 = sbr.rel target = $region54
            $region59: #{tpu_custom_call.1} parent=51 // loop_exit
              _
          $region52: #{tpu_custom_call.1} parent=43 // pred_fallthru
            _
          // Predicated region
          $region75: #{tpu_custom_call.1} parent=43 // pred_check
            _
          $region76: #{tpu_custom_call.1} parent=43 // pred_check_branch
            %250 = sbr.rel (0) target = $region78
          $region77: #{tpu_custom_call.1} parent=43 // pred_region
            %251 = vsyncadd [#allocation4], 512
          $region78: #{tpu_custom_call.1} parent=43 // pred_fallthru
            _
          %v252 = vld [vmem:[%s1] sm:$0xf]
          %v253 = vld [vmem:[%s1 + $0x4] sm:$0xf]
          %v254 = vld [vmem:[%s1 + $0x8] sm:$0xf]
          %v255 = vld [vmem:[%s1 + $0xc] sm:$0xf]
          %v256 = vld [vmem:[%s1 + $0x10] sm:$0xf]
          %v257 = vld [vmem:[%s1 + $0x14] sm:$0xf]
          %v258 = vld [vmem:[%s1 + $0x18] sm:$0xf]
          %v259 = vld [vmem:[%s1 + $0x1c] sm:$0xf]
          %v260 = vld [vmem:[%s2] sm:$0xf]
          %v261 = vld [vmem:[%s2 + $0x4] sm:$0xf]
          %v262 = vld [vmem:[%s3] sm:$0x1]
          %v264 = vlaneseq
          %v265 = vshrl.u32 %v264, 7
          %v266 = vsub.s32 0, %v265
          %v267 = vrot.slane %v262, %v266
          %v277 = vunpack.c.l.b16 %v252
          %v278 = vunpack.c.l.b16 %v253
          %v279 = vunpack.c.l.b16 %v254
          %v280 = vunpack.c.l.b16 %v255
          %v281 = vunpack.c.l.b16 %v256
          %v282 = vunpack.c.l.b16 %v257
          %v283 = vunpack.c.l.b16 %v258
          %v284 = vunpack.c.l.b16 %v259
          %v285 = vpack.c.b16 %v278, %v277
          %v286 = vpack.c.b16 %v280, %v279
          %v287 = vpack.c.b16 %v282, %v281
          %v288 = vpack.c.b16 %v284, %v283
          %v291 = vunpack.c.l.b16 %v260
          %v292 = vunpack.c.l.b16 %v261
          %v293 = vpack.c.b16 %v292, %v291
          %vm295 = vcmask 130048
          %v297 = vsel %vm295, %v285, 0
          %v300 = vsel %vm295, %v286, 0
          %v303 = vsel %vm295, %v287, 0
          %v306 = vsel %vm295, %v288, 0
          %308 = vmatprep.subr.bf16.mxu0 0
          %309 = vmatpush1.bf16.msra.mxu0 %v293
          %310 = vmatprep.subr.bf16.mxu0 0
          %311 = vmatpush1.bf16.msra.mxu0 0
          %312 = vmatprep.subr.bf16.mxu0 0
          %313 = vmatpush1.bf16.msra.mxu0 0
          %314 = vmatprep.subr.bf16.mxu0 0
          %315 = vmatpush1.bf16.msra.mxu0 0
          %316 = vmatprep.subr.bf16.mxu0 0
          %317 = vmatpush1.bf16.msra.mxu0 0
          %318 = vmatprep.subr.bf16.mxu0 0
          %319 = vmatpush1.bf16.msra.mxu0 0
          %320 = vmatprep.subr.bf16.mxu0 0
          %321 = vmatpush1.bf16.msra.mxu0 0
          %322 = vmatprep.subr.bf16.mxu0 0
          %323 = vmatpush1.bf16.msra.mxu0 0
          %324 = vmatprep.subr.bf16.mxu0 0
          %325 = vmatpush1.bf16.msra.mxu0 0
          %326 = vmatprep.subr.bf16.mxu0 0
          %327 = vmatpush1.bf16.msra.mxu0 0
          %328 = vmatprep.subr.bf16.mxu0 0
          %329 = vmatpush1.bf16.msra.mxu0 0
          %330 = vmatprep.subr.bf16.mxu0 0
          %331 = vmatpush1.bf16.msra.mxu0 0
          %332 = vmatprep.subr.bf16.mxu0 0
          %333 = vmatpush1.bf16.msra.mxu0 0
          %334 = vmatprep.subr.bf16.mxu0 0
          %335 = vmatpush1.bf16.msra.mxu0 0
          %336 = vmatprep.subr.bf16.mxu0 0
          %337 = vmatpush1.bf16.msra.mxu0 0
          %338 = vmatprep.subr.bf16.mxu0 0
          %339 = vmatpush1.bf16.msra.mxu0 0
          %340 = vmatprep.mubr.bf16.mxu0 0
          %341 = vmatmul.mubr.bf16.gmra.mrb[0].mxu0 %v297
          %v342 = vpop.f32.mrb[0].mxu0
          %v343 = vadd.f32 %v267, %v342
          %v344 = vpop.f32.mrb[0].mxu0
          %v345 = vpop.f32.mrb[0].mxu0
          %v346 = vadd.f32 %v267, %v345
          %v347 = vpop.f32.mrb[0].mxu0
          %348 = vmatprep.mubr.bf16.mxu0 0
          %349 = vmatmul.mubr.bf16.gmra.mrb[0].mxu0 %v300
          %v350 = vpop.f32.mrb[0].mxu0
          %v351 = vadd.f32 %v267, %v350
          %v352 = vpop.f32.mrb[0].mxu0
          %v353 = vpop.f32.mrb[0].mxu0
          %v354 = vadd.f32 %v267, %v353
          %v355 = vpop.f32.mrb[0].mxu0
          %356 = vmatprep.mubr.bf16.mxu0 0
          %357 = vmatmul.mubr.bf16.gmra.mrb[0].mxu0 %v303
          %v358 = vpop.f32.mrb[0].mxu0
          %v359 = vadd.f32 %v267, %v358
          %v360 = vpop.f32.mrb[0].mxu0
          %v361 = vpop.f32.mrb[0].mxu0
          %v362 = vadd.f32 %v267, %v361
          %v363 = vpop.f32.mrb[0].mxu0
          %364 = vmatprep.mubr.bf16.mxu0 0
          %365 = vmatmul.mubr.bf16.gmra.mrb[0].mxu0 %v306
          %v366 = vpop.f32.mrb[0].mxu0
          %v367 = vadd.f32 %v267, %v366
          %v368 = vpop.f32.mrb[0].mxu0
          %v369 = vpop.f32.mrb[0].mxu0
          %v370 = vadd.f32 %v267, %v369
          %v371 = vpop.f32.mrb[0].mxu0
          %372 = vdwg.mxu0
          %v373 = vmax.f32 %v343, 0.0
          %v374 = vmax.f32 %v346, 0.0
          %v375 = vmax.f32 %v351, 0.0
          %v376 = vmax.f32 %v354, 0.0
          %v377 = vmax.f32 %v359, 0.0
          %v378 = vmax.f32 %v362, 0.0
          %v379 = vmax.f32 %v367, 0.0
          %v380 = vmax.f32 %v370, 0.0
          %v381 = vpack.c.bf16 %v374, %v373
          %v382 = vpack.c.bf16 %v376, %v375
          %v383 = vpack.c.bf16 %v378, %v377
          %v384 = vpack.c.bf16 %v380, %v379
          %v385 = vld [vmem:[%s4] sm:$0xf]
          %v386 = vld [vmem:[%s4 + $0x4] sm:$0xf]
          %v387 = vld [vmem:[%s4 + $0x8] sm:$0xf]
          %v388 = vld [vmem:[%s4 + $0xc] sm:$0xf]
          %v389 = vld [vmem:[%s5] sm:$0x1]
          %v391 = vlaneseq
          %v392 = vshrl.u32 %v391, 7
          %v393 = vsub.s32 0, %v392
          %v394 = vrot.slane %v389, %v393
          %v400 = vunpack.c.l.b16 %v385
          %v401 = vunpack.c.l.b16 %v386
          %v402 = vunpack.c.l.b16 %v387
          %v403 = vunpack.c.l.b16 %v388
          %v404 = vpack.c.b16 %v401, %v400
          %v405 = vpack.c.b16 %v403, %v402
          %vm408 = vcmask 261120
          %v410 = vsel %vm408, %v381, 0
          %v413 = vsel %vm408, %v382, 0
          %v416 = vsel %vm408, %v383, 0
          %v419 = vsel %vm408, %v384, 0
          %421 = vmatprep.subr.bf16.mxu0 0
          %422 = vmatpush1.bf16.msra.mxu0 %v404
          %423 = vmatprep.subr.bf16.mxu0 0
          %424 = vmatpush1.bf16.msra.mxu0 %v405
          %425 = vmatprep.subr.bf16.mxu0 0
          %426 = vmatpush1.bf16.msra.mxu0 0
          %427 = vmatprep.subr.bf16.mxu0 0
          %428 = vmatpush1.bf16.msra.mxu0 0
          %429 = vmatprep.subr.bf16.mxu0 0
          %430 = vmatpush1.bf16.msra.mxu0 0
          %431 = vmatprep.subr.bf16.mxu0 0
          %432 = vmatpush1.bf16.msra.mxu0 0
          %433 = vmatprep.subr.bf16.mxu0 0
          %434 = vmatpush1.bf16.msra.mxu0 0
          %435 = vmatprep.subr.bf16.mxu0 0
          %436 = vmatpush1.bf16.msra.mxu0 0
          %437 = vmatprep.subr.bf16.mxu0 0
          %438 = vmatpush1.bf16.msra.mxu0 0
          %439 = vmatprep.subr.bf16.mxu0 0
          %440 = vmatpush1.bf16.msra.mxu0 0
          %441 = vmatprep.subr.bf16.mxu0 0
          %442 = vmatpush1.bf16.msra.mxu0 0
          %443 = vmatprep.subr.bf16.mxu0 0
          %444 = vmatpush1.bf16.msra.mxu0 0
          %445 = vmatprep.subr.bf16.mxu0 0
          %446 = vmatpush1.bf16.msra.mxu0 0
          %447 = vmatprep.subr.bf16.mxu0 0
          %448 = vmatpush1.bf16.msra.mxu0 0
          %449 = vmatprep.subr.bf16.mxu0 0
          %450 = vmatpush1.bf16.msra.mxu0 0
          %451 = vmatprep.subr.bf16.mxu0 0
          %452 = vmatpush1.bf16.msra.mxu0 0
          %453 = vmatprep.mubr.bf16.mxu0 0
          %454 = vmatmul.mubr.bf16.gmra.mrb[0].mxu0 %v410
          %v455 = vpop.f32.mrb[0].mxu0
          %v456 = vadd.f32 %v394, %v455
          %v457 = vpop.f32.mrb[0].mxu0
          %v458 = vpop.f32.mrb[0].mxu0
          %v459 = vadd.f32 %v394, %v458
          %v460 = vpop.f32.mrb[0].mxu0
          %461 = vmatprep.mubr.bf16.mxu0 0
          %462 = vmatmul.mubr.bf16.gmra.mrb[0].mxu0 %v413
          %v463 = vpop.f32.mrb[0].mxu0
          %v464 = vadd.f32 %v394, %v463
          %v465 = vpop.f32.mrb[0].mxu0
          %v466 = vpop.f32.mrb[0].mxu0
          %v467 = vadd.f32 %v394, %v466
          %v468 = vpop.f32.mrb[0].mxu0
          %469 = vmatprep.mubr.bf16.mxu0 0
          %470 = vmatmul.mubr.bf16.gmra.mrb[0].mxu0 %v416
          %v471 = vpop.f32.mrb[0].mxu0
          %v472 = vadd.f32 %v394, %v471
          %v473 = vpop.f32.mrb[0].mxu0
          %v474 = vpop.f32.mrb[0].mxu0
          %v475 = vadd.f32 %v394, %v474
          %v476 = vpop.f32.mrb[0].mxu0
          %477 = vmatprep.mubr.bf16.mxu0 0
          %478 = vmatmul.mubr.bf16.gmra.mrb[0].mxu0 %v419
          %v479 = vpop.f32.mrb[0].mxu0
          %v480 = vadd.f32 %v394, %v479
          %v481 = vpop.f32.mrb[0].mxu0
          %v482 = vpop.f32.mrb[0].mxu0
          %v483 = vadd.f32 %v394, %v482
          %v484 = vpop.f32.mrb[0].mxu0
          %485 = vdwg.mxu0
          %v486 = vpack.c.bf16 %v459, %v456
          %v487 = vpack.c.bf16 %v467, %v464
          %v488 = vpack.c.bf16 %v475, %v472
          %v489 = vpack.c.bf16 %v483, %v480
          %490 = vst [vmem:[#allocation2] sm:$0xff] %v486
          %491 = vst [vmem:[#allocation2 + $0x8] sm:$0xff] %v487
          %492 = vst [vmem:[#allocation2 + $0x10] sm:$0xff] %v488
          %493 = vst [vmem:[#allocation2 + $0x18] sm:$0xff] %v489
          %s494 = scalar_lea.vmem [#allocation2], 32
          %495 = vst [vmem:[%s494] sm:$0xff] 0
          %496 = vst [vmem:[%s494 + $0x8] sm:$0xff] 0
          %497 = vst [vmem:[%s494 + $0x10] sm:$0xff] 0
          %498 = vst [vmem:[%s494 + $0x18] sm:$0xff] 0
          %s499 = sld [smem:[#allocation6]]
          %s500 = smul.f32 %s499, 0.5
          %v501 = vstv %s500
          %v502 = vmul.f32 %v501, %v456
          %v503 = vmul.f32 %v501, %v459
          %v504 = vmul.f32 %v501, %v464
          %v505 = vmul.f32 %v501, %v467
          %v506 = vmul.f32 %v501, %v472
          %v507 = vmul.f32 %v501, %v475
          %v508 = vmul.f32 %v501, %v480
          %v509 = vmul.f32 %v501, %v483
          %510 = vst [vmem:[#allocation7] sm:$0xff] %v502
          %511 = vst [vmem:[#allocation7 + $0x8] sm:$0xff] %v503
          %512 = vst [vmem:[#allocation7 + $0x10] sm:$0xff] %v504
          %513 = vst [vmem:[#allocation7 + $0x18] sm:$0xff] %v505
          %514 = vst [vmem:[#allocation7 + $0x20] sm:$0xff] %v506
          %515 = vst [vmem:[#allocation7 + $0x28] sm:$0xff] %v507
          %516 = vst [vmem:[#allocation7 + $0x30] sm:$0xff] %v508
          %517 = vst [vmem:[#allocation7 + $0x38] sm:$0xff] %v509
          %s518 = smul.u32 4, 8
          %s519 = smul.u32 %s518, 1
          %s520 = sshll.u32 %s519, 4
          %521 = dma.done [#allocation4], %s520
        $region44: #{tpu_custom_call.1} parent=39 // pred_fallthru
          _
        %p522 = scmp.ge.s32.totalorder %s25, 1
        // Predicated region
        $region79: #{tpu_custom_call.1} parent=39 // pred_check
          %p523 = pneg %p522
        $region80: #{tpu_custom_call.1} parent=39 // pred_check_branch
          %525 = sbr.rel (%p523) target = $region82
        $region81: #{tpu_custom_call.1} parent=39 // pred_region
          %p526 = scmp.eq.s32.totalorder %s25, 1
          %s527 = scalar_select %p526, 1.0, 2.0
          %s528 = sld [smem:[#allocation6 + %s25]]
          %v529 = vld [vmem:[#allocation3] sm:$0xff]
          %v530 = vld [vmem:[#allocation3 + $0x8] sm:$0xff]
          %v531 = vld [vmem:[#allocation3 + $0x10] sm:$0xff]
          %v532 = vld [vmem:[#allocation3 + $0x18] sm:$0xff]
          %p533 = scmp.lt.s32.totalorder %s25, 0
          %s534 = ssub.s32 0, %s25
          %s535 = scalar_select %p533, %s534, %s25
          %s536 = sand.u32 %s535, 1
          %s537 = ssub.s32 0, %s536
          %s538 = scalar_select %p533, %s537, %s536
          %p539 = scmp.ne.s32.totalorder %s538, 0
          %p540 = scmp.lt.s32.totalorder %s538, 0
          %p541 = pnand %p540, %p539
          %p542 = pneg %p541
          %s543 = sadd.s32 %s538, 2
          %s544 = scalar_select %p542, %s543, %s538
          %p545 = scmp.eq.s32.totalorder %s544, 1
          // Predicated region
          $region83: #{tpu_custom_call.1} parent=81 // pred_check
            %p546 = pneg %p545
          $region84: #{tpu_custom_call.1} parent=81 // pred_check_branch
            %548 = sbr.rel (%p546) target = $region86
          $region85: #{tpu_custom_call.1} parent=81 // pred_region
            %v549 = vld [vmem:[#allocation2] sm:$0xff]
            %v550 = vld [vmem:[#allocation2 + $0x8] sm:$0xff]
            %v551 = vld [vmem:[#allocation2 + $0x10] sm:$0xff]
            %v552 = vld [vmem:[#allocation2 + $0x18] sm:$0xff]
            %vm553 = vcmask 523264
            %v555 = vsel %vm553, %v529, 0
            %v558 = vsel %vm553, %v530, 0
            %v561 = vsel %vm553, %v531, 0
            %v564 = vsel %vm553, %v532, 0
            %566 = vmatprep.subr.bf16.mxu0 0
            %567 = vmatpush1.bf16.msra.mxu0 %v549
            %568 = vmatprep.subr.bf16.mxu0 0
            %569 = vmatpush1.bf16.msra.mxu0 %v550
            %570 = vmatprep.subr.bf16.mxu0 0
            %571 = vmatpush1.bf16.msra.mxu0 %v551
            %572 = vmatprep.subr.bf16.mxu0 0
            %573 = vmatpush1.bf16.msra.mxu0 %v552
            %574 = vmatprep.subr.bf16.mxu0 0
            %575 = vmatpush1.bf16.msra.mxu0 0
            %576 = vmatprep.subr.bf16.mxu0 0
            %577 = vmatpush1.bf16.msra.mxu0 0
            %578 = vmatprep.subr.bf16.mxu0 0
            %579 = vmatpush1.bf16.msra.mxu0 0
            %580 = vmatprep.subr.bf16.mxu0 0
            %581 = vmatpush1.bf16.msra.mxu0 0
            %582 = vmatprep.subr.bf16.mxu0 0
            %583 = vmatpush1.bf16.msra.mxu0 0
            %584 = vmatprep.subr.bf16.mxu0 0
            %585 = vmatpush1.bf16.msra.mxu0 0
            %586 = vmatprep.subr.bf16.mxu0 0
            %587 = vmatpush1.bf16.msra.mxu0 0
            %588 = vmatprep.subr.bf16.mxu0 0
            %589 = vmatpush1.bf16.msra.mxu0 0
            %590 = vmatprep.subr.bf16.mxu0 0
            %591 = vmatpush1.bf16.msra.mxu0 0
            %592 = vmatprep.subr.bf16.mxu0 0
            %593 = vmatpush1.bf16.msra.mxu0 0
            %594 = vmatprep.subr.bf16.mxu0 0
            %595 = vmatpush1.bf16.msra.mxu0 0
            %596 = vmatprep.subr.bf16.mxu0 0
            %597 = vmatpush1.bf16.msra.mxu0 0
            %598 = vmatprep.mubr.bf16.mxu0 0
            %599 = vmatmul.mubr.bf16.gmra.mrb[0].mxu0 %v555
            %v600 = vpop.f32.mrb[0].mxu0
            %v601 = vadd.f32 0.0, %v600
            %v602 = vpop.f32.mrb[0].mxu0
            %v603 = vpop.f32.mrb[0].mxu0
            %v604 = vadd.f32 0.0, %v603
            %v605 = vpop.f32.mrb[0].mxu0
            %606 = vmatprep.mubr.bf16.mxu0 0
            %607 = vmatmul.mubr.bf16.gmra.mrb[0].mxu0 %v558
            %v608 = vpop.f32.mrb[0].mxu0
            %v609 = vadd.f32 0.0, %v608
            %v610 = vpop.f32.mrb[0].mxu0
            %v611 = vpop.f32.mrb[0].mxu0
            %v612 = vadd.f32 0.0, %v611
            %v613 = vpop.f32.mrb[0].mxu0
            %614 = vmatprep.mubr.bf16.mxu0 0
            %615 = vmatmul.mubr.bf16.gmra.mrb[0].mxu0 %v561
            %v616 = vpop.f32.mrb[0].mxu0
            %v617 = vadd.f32 0.0, %v616
            %v618 = vpop.f32.mrb[0].mxu0
            %v619 = vpop.f32.mrb[0].mxu0
            %v620 = vadd.f32 0.0, %v619
            %v621 = vpop.f32.mrb[0].mxu0
            %622 = vmatprep.mubr.bf16.mxu0 0
            %623 = vmatmul.mubr.bf16.gmra.mrb[0].mxu0 %v564
            %v624 = vpop.f32.mrb[0].mxu0
            %v625 = vadd.f32 0.0, %v624
            %v626 = vpop.f32.mrb[0].mxu0
            %v627 = vpop.f32.mrb[0].mxu0
            %v628 = vadd.f32 0.0, %v627
            %v629 = vpop.f32.mrb[0].mxu0
            %630 = vdwg.mxu0
            %v631 = vstv %s527
            %v632 = vmul.f32 %v631, %v601
            %v633 = vmul.f32 %v631, %v604
            %v634 = vmul.f32 %v631, %v609
            %v635 = vmul.f32 %v631, %v612
            %v636 = vmul.f32 %v631, %v617
            %v637 = vmul.f32 %v631, %v620
            %v638 = vmul.f32 %v631, %v625
            %v639 = vmul.f32 %v631, %v628
            %s640 = scalar_lea.vmem [#allocation2], 32
            %v641 = vld [vmem:[%s640] sm:$0xff]
            %v642 = vld [vmem:[%s640 + $0x8] sm:$0xff]
            %v643 = vld [vmem:[%s640 + $0x10] sm:$0xff]
            %v644 = vld [vmem:[%s640 + $0x18] sm:$0xff]
            %v645 = vunpack.c.l.bf16 %v641
            %v646 = vunpack.c.h.bf16 %v641
            %v647 = vunpack.c.l.bf16 %v642
            %v648 = vunpack.c.h.bf16 %v642
            %v649 = vunpack.c.l.bf16 %v643
            %v650 = vunpack.c.h.bf16 %v643
            %v651 = vunpack.c.l.bf16 %v644
            %v652 = vunpack.c.h.bf16 %v644
            %v653 = vsub.f32 %v632, %v645
            %v654 = vsub.f32 %v633, %v646
            %v655 = vsub.f32 %v634, %v647
            %v656 = vsub.f32 %v635, %v648
            %v657 = vsub.f32 %v636, %v649
            %v658 = vsub.f32 %v637, %v650
            %v659 = vsub.f32 %v638, %v651
            %v660 = vsub.f32 %v639, %v652
            %v661 = vld [vmem:[#allocation7] sm:$0xff]
            %v662 = vld [vmem:[#allocation7 + $0x8] sm:$0xff]
            %v663 = vld [vmem:[#allocation7 + $0x10] sm:$0xff]
            %v664 = vld [vmem:[#allocation7 + $0x18] sm:$0xff]
            %v665 = vld [vmem:[#allocation7 + $0x20] sm:$0xff]
            %v666 = vld [vmem:[#allocation7 + $0x28] sm:$0xff]
            %v667 = vld [vmem:[#allocation7 + $0x30] sm:$0xff]
            %v668 = vld [vmem:[#allocation7 + $0x38] sm:$0xff]
            %v669 = vstv %s528
            %v670 = vmul.f32 %v669, %v653
            %v671 = vmul.f32 %v669, %v654
            %v672 = vmul.f32 %v669, %v655
            %v673 = vmul.f32 %v669, %v656
            %v674 = vmul.f32 %v669, %v657
            %v675 = vmul.f32 %v669, %v658
            %v676 = vmul.f32 %v669, %v659
            %v677 = vmul.f32 %v669, %v660
            %v678 = vadd.f32 %v661, %v670
            %v679 = vadd.f32 %v662, %v671
            %v680 = vadd.f32 %v663, %v672
            %v681 = vadd.f32 %v664, %v673
            %v682 = vadd.f32 %v665, %v674
            %v683 = vadd.f32 %v666, %v675
            %v684 = vadd.f32 %v667, %v676
            %v685 = vadd.f32 %v668, %v677
            %686 = vst [vmem:[#allocation7] sm:$0xff] %v678
            %687 = vst [vmem:[#allocation7 + $0x8] sm:$0xff] %v679
            %688 = vst [vmem:[#allocation7 + $0x10] sm:$0xff] %v680
            %689 = vst [vmem:[#allocation7 + $0x18] sm:$0xff] %v681
            %690 = vst [vmem:[#allocation7 + $0x20] sm:$0xff] %v682
            %691 = vst [vmem:[#allocation7 + $0x28] sm:$0xff] %v683
            %692 = vst [vmem:[#allocation7 + $0x30] sm:$0xff] %v684
            %693 = vst [vmem:[#allocation7 + $0x38] sm:$0xff] %v685
            %v694 = vpack.c.bf16 %v654, %v653
            %v695 = vpack.c.bf16 %v656, %v655
            %v696 = vpack.c.bf16 %v658, %v657
            %v697 = vpack.c.bf16 %v660, %v659
            %698 = vst [vmem:[%s640] sm:$0xff] %v694
            %699 = vst [vmem:[%s640 + $0x8] sm:$0xff] %v695
            %700 = vst [vmem:[%s640 + $0x10] sm:$0xff] %v696
            %701 = vst [vmem:[%s640 + $0x18] sm:$0xff] %v697
          $region86: #{tpu_custom_call.1} parent=81 // pred_fallthru
            _
          %p702 = scmp.eq.s32.totalorder %s544, 0
          // Predicated region
          $region87: #{tpu_custom_call.1} parent=81 // pred_check
            %p703 = pneg %p702
          $region88: #{tpu_custom_call.1} parent=81 // pred_check_branch
            %705 = sbr.rel (%p703) target = $region90
          $region89: #{tpu_custom_call.1} parent=81 // pred_region
            %s706 = scalar_lea.vmem [#allocation2], 32
            %v707 = vld [vmem:[%s706] sm:$0xff]
            %v708 = vld [vmem:[%s706 + $0x8] sm:$0xff]
            %v709 = vld [vmem:[%s706 + $0x10] sm:$0xff]
            %v710 = vld [vmem:[%s706 + $0x18] sm:$0xff]
            %vm711 = vcmask 523264
            %v713 = vsel %vm711, %v529, 0
            %v716 = vsel %vm711, %v530, 0
            %v719 = vsel %vm711, %v531, 0
            %v722 = vsel %vm711, %v532, 0
            %724 = vmatprep.subr.bf16.mxu0 0
            %725 = vmatpush1.bf16.msra.mxu0 %v707
            %726 = vmatprep.subr.bf16.mxu0 0
            %727 = vmatpush1.bf16.msra.mxu0 %v708
            %728 = vmatprep.subr.bf16.mxu0 0
            %729 = vmatpush1.bf16.msra.mxu0 %v709
            %730 = vmatprep.subr.bf16.mxu0 0
            %731 = vmatpush1.bf16.msra.mxu0 %v710
            %732 = vmatprep.subr.bf16.mxu0 0
            %733 = vmatpush1.bf16.msra.mxu0 0
            %734 = vmatprep.subr.bf16.mxu0 0
            %735 = vmatpush1.bf16.msra.mxu0 0
            %736 = vmatprep.subr.bf16.mxu0 0
            %737 = vmatpush1.bf16.msra.mxu0 0
            %738 = vmatprep.subr.bf16.mxu0 0
            %739 = vmatpush1.bf16.msra.mxu0 0
            %740 = vmatprep.subr.bf16.mxu0 0
            %741 = vmatpush1.bf16.msra.mxu0 0
            %742 = vmatprep.subr.bf16.mxu0 0
            %743 = vmatpush1.bf16.msra.mxu0 0
            %744 = vmatprep.subr.bf16.mxu0 0
            %745 = vmatpush1.bf16.msra.mxu0 0
            %746 = vmatprep.subr.bf16.mxu0 0
            %747 = vmatpush1.bf16.msra.mxu0 0
            %748 = vmatprep.subr.bf16.mxu0 0
            %749 = vmatpush1.bf16.msra.mxu0 0
            %750 = vmatprep.subr.bf16.mxu0 0
            %751 = vmatpush1.bf16.msra.mxu0 0
            %752 = vmatprep.subr.bf16.mxu0 0
            %753 = vmatpush1.bf16.msra.mxu0 0
            %754 = vmatprep.subr.bf16.mxu0 0
            %755 = vmatpush1.bf16.msra.mxu0 0
            %756 = vmatprep.mubr.bf16.mxu0 0
            %757 = vmatmul.mubr.bf16.gmra.mrb[0].mxu0 %v713
            %v758 = vpop.f32.mrb[0].mxu0
            %v759 = vadd.f32 0.0, %v758
            %v760 = vpop.f32.mrb[0].mxu0
            %v761 = vpop.f32.mrb[0].mxu0
            %v762 = vadd.f32 0.0, %v761
            %v763 = vpop.f32.mrb[0].mxu0
            %764 = vmatprep.mubr.bf16.mxu0 0
            %765 = vmatmul.mubr.bf16.gmra.mrb[0].mxu0 %v716
            %v766 = vpop.f32.mrb[0].mxu0
            %v767 = vadd.f32 0.0, %v766
            %v768 = vpop.f32.mrb[0].mxu0
            %v769 = vpop.f32.mrb[0].mxu0
            %v770 = vadd.f32 0.0, %v769
            %v771 = vpop.f32.mrb[0].mxu0
            %772 = vmatprep.mubr.bf16.mxu0 0
            %773 = vmatmul.mubr.bf16.gmra.mrb[0].mxu0 %v719
            %v774 = vpop.f32.mrb[0].mxu0
            %v775 = vadd.f32 0.0, %v774
            %v776 = vpop.f32.mrb[0].mxu0
            %v777 = vpop.f32.mrb[0].mxu0
            %v778 = vadd.f32 0.0, %v777
            %v779 = vpop.f32.mrb[0].mxu0
            %780 = vmatprep.mubr.bf16.mxu0 0
            %781 = vmatmul.mubr.bf16.gmra.mrb[0].mxu0 %v722
            %v782 = vpop.f32.mrb[0].mxu0
            %v783 = vadd.f32 0.0, %v782
            %v784 = vpop.f32.mrb[0].mxu0
            %v785 = vpop.f32.mrb[0].mxu0
            %v786 = vadd.f32 0.0, %v785
            %v787 = vpop.f32.mrb[0].mxu0
            %788 = vdwg.mxu0
            %v789 = vstv %s527
            %v790 = vmul.f32 %v789, %v759
            %v791 = vmul.f32 %v789, %v762
            %v792 = vmul.f32 %v789, %v767
            %v793 = vmul.f32 %v789, %v770
            %v794 = vmul.f32 %v789, %v775
            %v795 = vmul.f32 %v789, %v778
            %v796 = vmul.f32 %v789, %v783
            %v797 = vmul.f32 %v789, %v786
            %v798 = vld [vmem:[#allocation2] sm:$0xff]
            %v799 = vld [vmem:[#allocation2 + $0x8] sm:$0xff]
            %v800 = vld [vmem:[#allocation2 + $0x10] sm:$0xff]
            %v801 = vld [vmem:[#allocation2 + $0x18] sm:$0xff]
            %v802 = vunpack.c.l.bf16 %v798
            %v803 = vunpack.c.h.bf16 %v798
            %v804 = vunpack.c.l.bf16 %v799
            %v805 = vunpack.c.h.bf16 %v799
            %v806 = vunpack.c.l.bf16 %v800
            %v807 = vunpack.c.h.bf16 %v800
            %v808 = vunpack.c.l.bf16 %v801
            %v809 = vunpack.c.h.bf16 %v801
            %v810 = vsub.f32 %v790, %v802
            %v811 = vsub.f32 %v791, %v803
            %v812 = vsub.f32 %v792, %v804
            %v813 = vsub.f32 %v793, %v805
            %v814 = vsub.f32 %v794, %v806
            %v815 = vsub.f32 %v795, %v807
            %v816 = vsub.f32 %v796, %v808
            %v817 = vsub.f32 %v797, %v809
            %v818 = vld [vmem:[#allocation7] sm:$0xff]
            %v819 = vld [vmem:[#allocation7 + $0x8] sm:$0xff]
            %v820 = vld [vmem:[#allocation7 + $0x10] sm:$0xff]
            %v821 = vld [vmem:[#allocation7 + $0x18] sm:$0xff]
            %v822 = vld [vmem:[#allocation7 + $0x20] sm:$0xff]
            %v823 = vld [vmem:[#allocation7 + $0x28] sm:$0xff]
            %v824 = vld [vmem:[#allocation7 + $0x30] sm:$0xff]
            %v825 = vld [vmem:[#allocation7 + $0x38] sm:$0xff]
            %v826 = vstv %s528
            %v827 = vmul.f32 %v826, %v810
            %v828 = vmul.f32 %v826, %v811
            %v829 = vmul.f32 %v826, %v812
            %v830 = vmul.f32 %v826, %v813
            %v831 = vmul.f32 %v826, %v814
            %v832 = vmul.f32 %v826, %v815
            %v833 = vmul.f32 %v826, %v816
            %v834 = vmul.f32 %v826, %v817
            %v835 = vadd.f32 %v818, %v827
            %v836 = vadd.f32 %v819, %v828
            %v837 = vadd.f32 %v820, %v829
            %v838 = vadd.f32 %v821, %v830
            %v839 = vadd.f32 %v822, %v831
            %v840 = vadd.f32 %v823, %v832
            %v841 = vadd.f32 %v824, %v833
            %v842 = vadd.f32 %v825, %v834
            %843 = vst [vmem:[#allocation7] sm:$0xff] %v835
            %844 = vst [vmem:[#allocation7 + $0x8] sm:$0xff] %v836
            %845 = vst [vmem:[#allocation7 + $0x10] sm:$0xff] %v837
            %846 = vst [vmem:[#allocation7 + $0x18] sm:$0xff] %v838
            %847 = vst [vmem:[#allocation7 + $0x20] sm:$0xff] %v839
            %848 = vst [vmem:[#allocation7 + $0x28] sm:$0xff] %v840
            %849 = vst [vmem:[#allocation7 + $0x30] sm:$0xff] %v841
            %850 = vst [vmem:[#allocation7 + $0x38] sm:$0xff] %v842
            %v851 = vpack.c.bf16 %v811, %v810
            %v852 = vpack.c.bf16 %v813, %v812
            %v853 = vpack.c.bf16 %v815, %v814
            %v854 = vpack.c.bf16 %v817, %v816
            %855 = vst [vmem:[#allocation2] sm:$0xff] %v851
            %856 = vst [vmem:[#allocation2 + $0x8] sm:$0xff] %v852
            %857 = vst [vmem:[#allocation2 + $0x10] sm:$0xff] %v853
            %858 = vst [vmem:[#allocation2 + $0x18] sm:$0xff] %v854
          $region90: #{tpu_custom_call.1} parent=81 // pred_fallthru
            _
        $region82: #{tpu_custom_call.1} parent=39 // pred_fallthru
          _
        %p859 = scmp.eq.s32.totalorder %s25, 10
        // Predicated region
        $region91: #{tpu_custom_call.1} parent=39 // pred_check
          %p860 = pneg %p859
        $region92: #{tpu_custom_call.1} parent=39 // pred_check_branch
          %862 = sbr.rel (%p860) target = $region94
        $region93: #{tpu_custom_call.1} parent=39 // pred_region
          %v863 = vld [vmem:[#allocation7] sm:$0xff]
          %v864 = vld [vmem:[#allocation7 + $0x8] sm:$0xff]
          %v865 = vld [vmem:[#allocation7 + $0x10] sm:$0xff]
          %v866 = vld [vmem:[#allocation7 + $0x18] sm:$0xff]
          %v867 = vld [vmem:[#allocation7 + $0x20] sm:$0xff]
          %v868 = vld [vmem:[#allocation7 + $0x28] sm:$0xff]
          %v869 = vld [vmem:[#allocation7 + $0x30] sm:$0xff]
          %v870 = vld [vmem:[#allocation7 + $0x38] sm:$0xff]
          %v871 = vlaneseq
          %v872 = vand.u32 %v871, 127
          %vm873 = vcmp.lt.s32.totalorder %v872, 8
          %v874 = vsel %vm873, %v863, -1e+30
          %v875 = vsel %vm873, %v864, -1e+30
          %v876 = vsel %vm873, %v865, -1e+30
          %v877 = vsel %vm873, %v866, -1e+30
          %v878 = vsel %vm873, %v867, -1e+30
          %v879 = vsel %vm873, %v868, -1e+30
          %v880 = vsel %vm873, %v869, -1e+30
          %v881 = vsel %vm873, %v870, -1e+30
          %882 = vmax.xlane.f32.xlu0 %v874
          %v883 = vpop.xlane.xlu0 %882
          %884 = vmax.xlane.f32.xlu0 %v875
          %v885 = vpop.xlane.xlu0 %884
          %886 = vmax.xlane.f32.xlu0 %v876
          %v887 = vpop.xlane.xlu0 %886
          %888 = vmax.xlane.f32.xlu0 %v877
          %v889 = vpop.xlane.xlu0 %888
          %890 = vmax.xlane.f32.xlu0 %v878
          %v891 = vpop.xlane.xlu0 %890
          %892 = vmax.xlane.f32.xlu0 %v879
          %v893 = vpop.xlane.xlu0 %892
          %894 = vmax.xlane.f32.xlu0 %v880
          %v895 = vpop.xlane.xlu0 %894
          %896 = vmax.xlane.f32.xlu0 %v881
          %v897 = vpop.xlane.xlu0 %896
          %v898 = vsub.f32 %v874, %v883
          %v899 = vsub.f32 %v875, %v885
          %v900 = vsub.f32 %v876, %v887
          %v901 = vsub.f32 %v877, %v889
          %v902 = vsub.f32 %v878, %v891
          %v903 = vsub.f32 %v879, %v893
          %v904 = vsub.f32 %v880, %v895
          %v905 = vsub.f32 %v881, %v897
          %v906 = vmul.f32 %v898, 1.442695
          %v907 = vpow.pop %v906
          %v908 = vmul.f32 %v899, 1.442695
          %v909 = vpow.pop %v908
          %v910 = vmul.f32 %v900, 1.442695
          %v911 = vpow.pop %v910
          %v912 = vmul.f32 %v901, 1.442695
          %v913 = vpow.pop %v912
          %v914 = vmul.f32 %v902, 1.442695
          %v915 = vpow.pop %v914
          %v916 = vmul.f32 %v903, 1.442695
          %v917 = vpow.pop %v916
          %v918 = vmul.f32 %v904, 1.442695
          %v919 = vpow.pop %v918
          %v920 = vmul.f32 %v905, 1.442695
          %v921 = vpow.pop %v920
          %922 = vadd.xlane.f32.xlu0 %v907
          %v923 = vpop.xlane.xlu0 %922
          %924 = vadd.xlane.f32.xlu0 %v909
          %v925 = vpop.xlane.xlu0 %924
          %926 = vadd.xlane.f32.xlu0 %v911
          %v927 = vpop.xlane.xlu0 %926
          %928 = vadd.xlane.f32.xlu0 %v913
          %v929 = vpop.xlane.xlu0 %928
          %930 = vadd.xlane.f32.xlu0 %v915
          %v931 = vpop.xlane.xlu0 %930
          %932 = vadd.xlane.f32.xlu0 %v917
          %v933 = vpop.xlane.xlu0 %932
          %934 = vadd.xlane.f32.xlu0 %v919
          %v935 = vpop.xlane.xlu0 %934
          %936 = vadd.xlane.f32.xlu0 %v921
          %v937 = vpop.xlane.xlu0 %936
          %v938 = vlog2.pop %v923
          %v939 = vmul.f32 %v938, 0.6931472
          %v940 = vlog2.pop %v925
          %v941 = vmul.f32 %v940, 0.6931472
          %v942 = vlog2.pop %v927
          %v943 = vmul.f32 %v942, 0.6931472
          %v944 = vlog2.pop %v929
          %v945 = vmul.f32 %v944, 0.6931472
          %v946 = vlog2.pop %v931
          %v947 = vmul.f32 %v946, 0.6931472
          %v948 = vlog2.pop %v933
          %v949 = vmul.f32 %v948, 0.6931472
          %v950 = vlog2.pop %v935
          %v951 = vmul.f32 %v950, 0.6931472
          %v952 = vlog2.pop %v937
          %v953 = vmul.f32 %v952, 0.6931472
          %v954 = vsub.f32 %v898, %v939
          %v955 = vsub.f32 %v899, %v941
          %v956 = vsub.f32 %v900, %v943
          %v957 = vsub.f32 %v901, %v945
          %v958 = vsub.f32 %v902, %v947
          %v959 = vsub.f32 %v903, %v949
          %v960 = vsub.f32 %v904, %v951
          %v961 = vsub.f32 %v905, %v953
          %962 = vst [vmem:[#allocation7] sm:$0xff] %v954
          %963 = vst [vmem:[#allocation7 + $0x8] sm:$0xff] %v955
          %964 = vst [vmem:[#allocation7 + $0x10] sm:$0xff] %v956
          %965 = vst [vmem:[#allocation7 + $0x18] sm:$0xff] %v957
          %966 = vst [vmem:[#allocation7 + $0x20] sm:$0xff] %v958
          %967 = vst [vmem:[#allocation7 + $0x28] sm:$0xff] %v959
          %968 = vst [vmem:[#allocation7 + $0x30] sm:$0xff] %v960
          %969 = vst [vmem:[#allocation7 + $0x38] sm:$0xff] %v961
        $region94: #{tpu_custom_call.1} parent=39 // pred_fallthru
          _
        // Predicated region
        $region95: #{tpu_custom_call.1} parent=39 // pred_check
          %p970 = pneg %p143
        $region96: #{tpu_custom_call.1} parent=39 // pred_check_branch
          %972 = sbr.rel (%p970) target = $region98
        $region97: #{tpu_custom_call.1} parent=39 // pred_region
          %s974 = ssub.s32 1024, 1024
          %975 = vsyncadd [#allocation8], %s974
          %s976 = sshll.u32 [#allocation7], 4
          %s977 = int_to_ptr.vmem [resolvable:$true] %s976
          %982 = dma.vmem_to_hbm [thread:$0]  %s977, 1024, %s7, [#allocation8], 128, 128, 8
        $region98: #{tpu_custom_call.1} parent=39 // pred_fallthru
          _
        // Predicated region
        $region99: #{tpu_custom_call.1} parent=39 // pred_check
          %p983 = pneg %p143
        $region100: #{tpu_custom_call.1} parent=39 // pred_check_branch
          %985 = sbr.rel (%p983) target = $region102
        $region101: #{tpu_custom_call.1} parent=39 // pred_region
          %986 = dma.done [#allocation8], 1024
        $region102: #{tpu_custom_call.1} parent=39 // pred_fallthru
          _
      $region40: #{tpu_custom_call.1} parent=5 // pred_fallthru
        _
      %p987 = scmp.le.s32.totalorder 2, %s20
      // Predicated region
      $region103: #{tpu_custom_call.1} parent=5 // pred_check
        %p988 = pneg %p987
      $region104: #{tpu_custom_call.1} parent=5 // pred_check_branch
        %990 = sbr.rel (%p988) target = $region106
      $region105: #{tpu_custom_call.1} parent=5 // pred_region
        %s991 = ssub.s32 %s20, 2
      $region106: #{tpu_custom_call.1} parent=5 // pred_fallthru
        _
    $region6: #{tpu_custom_call.1} parent=1 // loop_footer
      %s24 = sadd.s32 1, %s20
    $region7: #{tpu_custom_call.1} parent=1 // loop_footer_branch
      %19 = sbr.rel target = $region3
    $region8: #{tpu_custom_call.1} parent=1 // loop_exit
      _
    %992 = vsyncpa [#allocation8], 1
    %s993 = scalar_lea.sflag [#allocation8], 1
    %994 = vsyncpa %s993, 1
  %995 = vsyncmov [#allocation4]
  %s996 = vpop.sfrf %995
  %p997 = scmp.eq.s32.totalorder %s996, 0
  %p998 = pneg %p997
  %1000 = shalt.err (%p998)

</llo_original>
